<compile_context>
chip_gen: v6e
topology: v6e:2x2x1
jax: 0.10.0
libtpu: 0.0.40
codegen_flags: <defaults>
</compile_context>

<pallas_src>
import jax
import jax.numpy as jnp
from jax.experimental import pallas as pl
from jax.experimental.pallas import tpu as pltpu

# ---- config (small synthetic sizes consistent with the module) ----
HIDDEN = 32          # config.hidden_size
MOE_INTER = 64       # config.moe_intermediate_size
N_EXPERTS = 4        # config.n_routed_experts
TOP_K = 2            # config.num_experts_per_tok
N_SHARED = 2         # config.n_shared_experts
SHARED_INTER = MOE_INTER * N_SHARED
BATCH, SEQ = 2, 8
T = BATCH * SEQ

E_TOTAL = N_EXPERTS + N_SHARED        # routed experts + shared pseudo-experts


def _round_up(a, b):
    return (a + b - 1) // b * b


# lane-aligned padded dims (zero padding is exact: padded rows/cols contribute 0)
H_PAD = _round_up(HIDDEN, 128)        # 128
I_PAD = _round_up(MOE_INTER, 128)     # 128


# ---------------- fused Pallas kernel ----------------

def _fused_moe_kernel(x_ref, wgu_ref, wd_ref, wdense_ref, o_ref):
    """grid = (token_tiles, E_TOTAL); the expert axis is the reduction axis.

    o_ref's block index is constant across the expert axis, so the output tile
    stays resident in VMEM and acts as the f32 accumulator (no scratch, no
    final copy pass). Shared experts are pseudo-experts with routing weight 1,
    so every step does identical work.
    """
    e = pl.program_id(1)

    @pl.when(e == 0)
    def _zero_acc():
        o_ref[...] = jnp.zeros_like(o_ref)

    x = x_ref[...]                                              # (TM, H_PAD) bf16
    inter = wd_ref.shape[0]                                     # I_PAD (128-aligned)

    # gate|up in one MXU pass: bf16 inputs, f32 accumulation.
    gu = jnp.dot(x, wgu_ref[...], preferred_element_type=jnp.float32)  # (TM, 2*I_PAD)
    g = gu[:, :inter]                                           # lane-aligned split
    u = gu[:, inter:]
    h = (g * jax.nn.sigmoid(g)) * u                             # silu(g) * u, in f32

    # Per-token routing weight for expert e: lane-select column e from the
    # resident (TM, E_TOTAL) block. Cheap (tiny cross-lane reduce), known to
    # lower cleanly; free filler under MXU slack.
    cols = jax.lax.broadcasted_iota(jnp.int32, wdense_ref.shape, 1)
    w_e = jnp.sum(jnp.where(cols == e, wdense_ref[...], 0.0),
                  axis=1, keepdims=True)                        # (TM, 1) f32

    contrib = jnp.dot(h.astype(wd_ref.dtype), wd_ref[...],
                      preferred_element_type=jnp.float32)       # (TM, H_PAD) f32
    o_ref[...] += contrib * w_e                                 # f32 accumulate


def fused_moe(x, wgu, wd, w_dense, *, token_tile):
    t_pad, h_pad = x.shape
    e_total, _, two_i = wgu.shape
    i_pad = wd.shape[1]
    grid = (pl.cdiv(t_pad, token_tile), e_total)
    return pl.pallas_call(
        _fused_moe_kernel,
        out_shape=jax.ShapeDtypeStruct((t_pad, h_pad), jnp.float32),
        grid_spec=pltpu.PrefetchScalarGridSpec(
            num_scalar_prefetch=0,
            grid=grid,
            in_specs=[
                # activations: tiled over tokens, shared across experts
                pl.BlockSpec((token_tile, h_pad), lambda ti, ei: (ti, 0)),
                # packed gate|up weights (routed + shared pseudo-experts)
                pl.BlockSpec((None, h_pad, two_i), lambda ti, ei: (ei, 0, 0)),
                # down-proj weights, one (pseudo-)expert per step
                pl.BlockSpec((None, i_pad, h_pad), lambda ti, ei: (ei, 0, 0)),
                # lane-dense routing weights (T_pad, E_TOTAL), resident
                pl.BlockSpec((token_tile, e_total), lambda ti, ei: (ti, 0)),
            ],
            # same block index across the expert axis => resident accumulator
            out_specs=pl.BlockSpec((token_tile, h_pad), lambda ti, ei: (ti, 0)),
        ),
        compiler_params=pltpu.CompilerParams(
            dimension_semantics=("parallel", "arbitrary"),
            # Toy sizes use ~1 MiB. At real sizes re-derive per generation:
            # v5e/v6e raise toward ~96-100 MiB of the 128 MiB physical;
            # v7x (64 MiB physical) budget ~48-56 MiB and tile the 2*I dim.
            vmem_limit_bytes=32 * 1024 * 1024,
        ),
    )(x, wgu, wd, w_dense)


# ---------------- wrapper (gating glue in plain JAX) ----------------

def moe_layer_forward(hidden_states, w_gate, wgu_all, wd_all):
    b, s, h = hidden_states.shape
    x = hidden_states.reshape(-1, h)                            # (T, H)
    t = x.shape[0]

    # MoEGate: logits, top-k of raw logits, softmax over the selected logits
    # (norm_topk_prob=False -> no renormalization). Kept in XLA: a (T, 4)
    # Pallas output is pure masked-store / launch overhead.
    logits = x @ w_gate                                         # (T, E) f32
    topk_vals, topk_idx = jax.lax.top_k(logits, TOP_K)
    topk_w = jax.nn.softmax(topk_vals, axis=-1)                 # (T, K)

    # dense per-token/per-expert routing weights (exactly 0 for unselected)
    one_hot = jax.nn.one_hot(topk_idx, N_EXPERTS, dtype=jnp.float32)   # (T,K,E)
    w_routed = jnp.einsum("tk,tke->te", topk_w, one_hot)        # (T, E)
    # shared pseudo-experts are always active with weight 1.0
    w_dense = jnp.concatenate(
        [w_routed, jnp.ones((t, N_SHARED), jnp.float32)], axis=1)      # (T, E_TOTAL)

    # token tiling: multiple of 8 (sublane), capped at 256 (MXU-friendly M on
    # v6e/v7x; >=2 tiles at real T shards across v7x's 2 TensorCores).
    token_tile = _round_up(t, 8) if t <= 256 else 256
    t_pad = _round_up(t, token_tile)

    # pad tokens + hidden to lane-dense shapes; padded rows/cols are zeros.
    x_pad = jnp.zeros((t_pad, H_PAD), jnp.bfloat16)
    x_pad = x_pad.at[:t, :h].set(x.astype(jnp.bfloat16))
    wdense_pad = jnp.zeros((t_pad, E_TOTAL), jnp.float32)
    wdense_pad = wdense_pad.at[:t].set(w_dense)

    y_pad = fused_moe(x_pad, wgu_all, wd_all, wdense_pad, token_tile=token_tile)
    return y_pad[:t, :h].reshape(b, s, h)


# ---------------- parameter init & packing ----------------

def init_params(key):
    ks = jax.random.split(key, 7)
    s_h = 1.0 / jnp.sqrt(HIDDEN)
    s_i = 1.0 / jnp.sqrt(MOE_INTER)
    s_si = 1.0 / jnp.sqrt(SHARED_INTER)
    return {
        # MoEGate.weight (kaiming-uniform in torch; deterministic uniform here),
        # stored transposed so logits = x @ w_gate
        "w_gate": jax.random.uniform(ks[0], (HIDDEN, N_EXPERTS), jnp.float32, -s_h, s_h),
        "wg": jax.random.uniform(ks[1], (N_EXPERTS, HIDDEN, MOE_INTER), jnp.float32, -s_h, s_h),
        "wu": jax.random.uniform(ks[2], (N_EXPERTS, HIDDEN, MOE_INTER), jnp.float32, -s_h, s_h),
        "wd": jax.random.uniform(ks[3], (N_EXPERTS, MOE_INTER, HIDDEN), jnp.float32, -s_i, s_i),
        "swg": jax.random.uniform(ks[4], (HIDDEN, SHARED_INTER), jnp.float32, -s_h, s_h),
        "swu": jax.random.uniform(ks[5], (HIDDEN, SHARED_INTER), jnp.float32, -s_h, s_h),
        "swd": jax.random.uniform(ks[6], (SHARED_INTER, HIDDEN), jnp.float32, -s_si, s_si),
    }


def pack_params(raw):
    """Pad to lane-aligned dims, fold shared experts in as pseudo-experts,
    pack gate|up along the output dim, cast to bf16 for the MXU."""
    def pad2(w, rows, cols):
        return jnp.pad(w, ((0, rows - w.shape[0]), (0, cols - w.shape[1])))

    gu_list, d_list = [], []
    for e in range(N_EXPERTS):
        g = pad2(raw["wg"][e], H_PAD, I_PAD)
        u = pad2(raw["wu"][e], H_PAD, I_PAD)
        gu_list.append(jnp.concatenate([g, u], axis=-1))        # (H_PAD, 2*I_PAD)
        d_list.append(pad2(raw["wd"][e], I_PAD, H_PAD))         # (I_PAD, H_PAD)
    # shared-experts MLP split column-wise into N_SHARED pseudo-experts
    # (the down-proj sums over the intermediate dim, so this is exact).
    for c in range(N_SHARED):
        sl = slice(c * MOE_INTER, (c + 1) * MOE_INTER)
        g = pad2(raw["swg"][:, sl], H_PAD, I_PAD)
        u = pad2(raw["swu"][:, sl], H_PAD, I_PAD)
        gu_list.append(jnp.concatenate([g, u], axis=-1))
        d_list.append(pad2(raw["swd"][sl, :], I_PAD, H_PAD))

    wgu_all = jnp.stack(gu_list).astype(jnp.bfloat16)           # (E_TOTAL, H_PAD, 2*I_PAD)
    wd_all = jnp.stack(d_list).astype(jnp.bfloat16)             # (E_TOTAL, I_PAD, H_PAD)
    return wgu_all, wd_all


# ---------------- pure-JAX reference (mirrors the torch module) ----------------

def reference_forward(hidden_states, raw):
    b, s, h = hidden_states.shape
    x = hidden_states.reshape(-1, h)
    logits = x @ raw["w_gate"]
    topk_vals, topk_idx = jax.lax.top_k(logits, TOP_K)
    topk_w = jax.nn.softmax(topk_vals, axis=-1)
    one_hot = jax.nn.one_hot(topk_idx, N_EXPERTS, dtype=jnp.float32)
    w_dense = jnp.einsum("tk,tke->te", topk_w, one_hot)

    # mirror the kernel's bf16 MXU inputs (f32 math on bf16-rounded values);
    # elementwise math in f32, matching the kernel exactly.
    def q(a):
        return a.astype(jnp.bfloat16).astype(jnp.float32)

    xq = q(x)
    y = jnp.zeros_like(x)
    for e in range(N_EXPERTS):
        g = xq @ q(raw["wg"][e])
        u = xq @ q(raw["wu"][e])
        hi = (g * jax.nn.sigmoid(g)) * u
        y = y + (q(hi) @ q(raw["wd"][e])) * w_dense[:, e:e + 1]
    g = xq @ q(raw["swg"])
    u = xq @ q(raw["swu"])
    hi = (g * jax.nn.sigmoid(g)) * u
    y = y + q(hi) @ q(raw["swd"])
    return y.reshape(b, s, h)


if __name__ == "__main__":
    key = jax.random.PRNGKey(0)
    k_x, k_p = jax.random.split(key)
    hidden_states = jax.random.normal(k_x, (BATCH, SEQ, HIDDEN), jnp.float32)
    raw = init_params(k_p)
    wgu_all, wd_all = pack_params(raw)

    y = moe_layer_forward(hidden_states, raw["w_gate"], wgu_all, wd_all)
    y = jax.block_until_ready(y)

    y_ref = reference_forward(hidden_states, raw)
    assert y.shape == (BATCH, SEQ, HIDDEN)
    max_err = float(jnp.max(jnp.abs(y - y_ref)))
    assert jnp.allclose(y, y_ref, rtol=1e-3, atol=1e-3), \
        f"mismatch vs reference (max abs err {max_err})"
    print("KERNEL_OK")
</pallas_src>

<mosaic_0001>
module attributes {stable_mosaic.version = 11 : i64} {
  func.func @_fused_moe_kernel(%arg0: i32, %arg1: i32, %arg2: memref<16x128xbf16, #tpu.memory_space<vmem>>, %arg3: memref<1x128x256xbf16, #tpu.memory_space<vmem>>, %arg4: memref<1x128x128xbf16, #tpu.memory_space<vmem>>, %arg5: memref<16x6xf32, #tpu.memory_space<vmem>>, %arg6: memref<16x128xf32, #tpu.memory_space<vmem>>) attributes {dimension_semantics = [#tpu.dimension_semantics<parallel>, #tpu.dimension_semantics<arbitrary>], iteration_bounds = array<i64: 1, 6>, scalar_prefetch = 0 : i64, scratch_operands = 0 : i64, tpu.core_type = #tpu.core_type<tc>, window_params = [{transform_indices = @transform_0, window_bounds = array<i64: 16, 128>}, {transform_indices = @transform_1, window_bounds = array<i64: 1, 128, 256>}, {transform_indices = @transform_2, window_bounds = array<i64: 1, 128, 128>}, {transform_indices = @transform_3, window_bounds = array<i64: 16, 6>}, {transform_indices = @transform_4, window_bounds = array<i64: 16, 128>}]} {
    %c0_i32 = arith.constant 0 : i32
    %0 = arith.cmpi eq, %arg1, %c0_i32 : i32
    %1 = arith.extui %0 : i1 to i32
    %c0_i32_0 = arith.constant 0 : i32
    %2 = arith.cmpi ne, %1, %c0_i32_0 : i32
    scf.if %2 {
      %cst_18 = arith.constant 0.000000e+00 : f32
      %33 = vector.broadcast %cst_18 : f32 to vector<16x128xf32>
      %c0_19 = arith.constant 0 : index
      %c0_20 = arith.constant 0 : index
      %34 = vector.load %arg6[%c0_19, %c0_20] : memref<16x128xf32, #tpu.memory_space<vmem>>, vector<16x128xf32>
      tpu.vector_store %arg6[%c0_19, %c0_20], %33 {strides = array<i32>} : memref<16x128xf32, #tpu.memory_space<vmem>>, vector<16x128xf32>,
    } else {
    }
    %c0 = arith.constant 0 : index
    %c0_1 = arith.constant 0 : index
    %3 = vector.load %arg2[%c0, %c0_1] : memref<16x128xbf16, #tpu.memory_space<vmem>>, vector<16x128xbf16>
    %c0_2 = arith.constant 0 : index
    %c0_3 = arith.constant 0 : index
    %c0_4 = arith.constant 0 : index
    %4 = vector.load %arg3[%c0_2, %c0_3, %c0_4] : memref<1x128x256xbf16, #tpu.memory_space<vmem>>, vector<1x128x256xbf16>
    %5 = vector.shape_cast %4 : vector<1x128x256xbf16> to vector<128x256xbf16>
    %cst = arith.constant dense<0.000000e+00> : vector<16x256xf32>
    %6 = tpu.matmul %3, %5, %cst {dimension_numbers = #tpu.dot_dimension_numbers<[1], [0], [0], [1], [0, 0, 1, 1], [], []>} : vector<16x128xbf16>, vector<128x256xbf16>, vector<16x256xf32> -> vector<16x256xf32>
    %7 = vector.extract_strided_slice %6 {offsets = [0, 0], sizes = [16, 128], strides = [1, 1]} : vector<16x256xf32> to vector<16x128xf32>
    %8 = vector.extract_strided_slice %6 {offsets = [0, 128], sizes = [16, 128], strides = [1, 1]} : vector<16x256xf32> to vector<16x128xf32>
    %9 = arith.negf %7 : vector<16x128xf32>
    %10 = math.exp %9 : vector<16x128xf32>
    %cst_5 = arith.constant 1.000000e+00 : f32
    %11 = vector.broadcast %cst_5 : f32 to vector<16x128xf32>
    %12 = arith.addf %11, %10 : vector<16x128xf32>
    %13 = arith.divf %11, %12 : vector<16x128xf32>
    %14 = arith.mulf %7, %13 : vector<16x128xf32>
    %15 = arith.mulf %14, %8 : vector<16x128xf32>
    %16 = tpu.iota {dimensions = array<i32: 1>} : vector<16x6xi32>
    %17 = vector.broadcast %arg1 : i32 to vector<16x6xi32>
    %18 = arith.cmpi eq, %16, %17 : vector<16x6xi32>
    %c0_6 = arith.constant 0 : index
    %c0_7 = arith.constant 0 : index
    %19 = vector.load %arg5[%c0_6, %c0_7] : memref<16x6xf32, #tpu.memory_space<vmem>>, vector<16x6xf32>
    %cst_8 = arith.constant 0.000000e+00 : f32
    %20 = vector.broadcast %cst_8 : f32 to vector<16x6xf32>
    %21 = arith.select %18, %19, %20 : vector<16x6xi1>, vector<16x6xf32>
    %cst_9 = arith.constant dense<0.000000e+00> : vector<16xf32>
    %22 = vector.multi_reduction <add>, %21, %cst_9 [1] : vector<16x6xf32> to vector<16xf32>
    %23 = vector.shape_cast %22 : vector<16xf32> to vector<16x1xf32>
    %24 = arith.truncf %15 : vector<16x128xf32> to vector<16x128xbf16>
    %c0_10 = arith.constant 0 : index
    %c0_11 = arith.constant 0 : index
    %c0_12 = arith.constant 0 : index
    %25 = vector.load %arg4[%c0_10, %c0_11, %c0_12] : memref<1x128x128xbf16, #tpu.memory_space<vmem>>, vector<1x128x128xbf16>
    %26 = vector.shape_cast %25 : vector<1x128x128xbf16> to vector<128x128xbf16>
    %cst_13 = arith.constant dense<0.000000e+00> : vector<16x128xf32>
    %27 = tpu.matmul %24, %26, %cst_13 {dimension_numbers = #tpu.dot_dimension_numbers<[1], [0], [0], [1], [0, 0, 1, 1], [], []>} : vector<16x128xbf16>, vector<128x128xbf16>, vector<16x128xf32> -> vector<16x128xf32>
    %c0_14 = arith.constant 0 : index
    %c0_15 = arith.constant 0 : index
    %28 = vector.load %arg6[%c0_14, %c0_15] : memref<16x128xf32, #tpu.memory_space<vmem>>, vector<16x128xf32>
    %29 = vector.broadcast %23 : vector<16x1xf32> to vector<16x128xf32>
    %30 = arith.mulf %27, %29 : vector<16x128xf32>
    %31 = arith.addf %28, %30 : vector<16x128xf32>
    %c0_16 = arith.constant 0 : index
    %c0_17 = arith.constant 0 : index
    %32 = vector.load %arg6[%c0_16, %c0_17] : memref<16x128xf32, #tpu.memory_space<vmem>>, vector<16x128xf32>
    tpu.vector_store %arg6[%c0_16, %c0_17], %31 {strides = array<i32>} : memref<16x128xf32, #tpu.memory_space<vmem>>, vector<16x128xf32>,
    return
  }
  func.func @transform_0(%arg0: i32, %arg1: i32) -> (i32, i32) {
    %c0_i32 = arith.constant 0 : i32
    %c0_i32_0 = arith.constant 0 : i32
    return %arg0, %c0_i32 : i32, i32
  }
  func.func @transform_1(%arg0: i32, %arg1: i32) -> (i32, i32, i32) {
    %c0_i32 = arith.constant 0 : i32
    %c0_i32_0 = arith.constant 0 : i32
    %c0_i32_1 = arith.constant 0 : i32
    return %arg1, %c0_i32, %c0_i32_0 : i32, i32, i32
  }
  func.func @transform_2(%arg0: i32, %arg1: i32) -> (i32, i32, i32) {
    %c0_i32 = arith.constant 0 : i32
    %c0_i32_0 = arith.constant 0 : i32
    %c0_i32_1 = arith.constant 0 : i32
    return %arg1, %c0_i32, %c0_i32_0 : i32, i32, i32
  }
  func.func @transform_3(%arg0: i32, %arg1: i32) -> (i32, i32) {
    %c0_i32 = arith.constant 0 : i32
    %c0_i32_0 = arith.constant 0 : i32
    return %arg0, %c0_i32 : i32, i32
  }
  func.func @transform_4(%arg0: i32, %arg1: i32) -> (i32, i32) {
    %c0_i32 = arith.constant 0 : i32
    %c0_i32_0 = arith.constant 0 : i32
    return %arg0, %c0_i32 : i32, i32
  }
}

</mosaic_0001>

<llo_original>
// kernel: tpu_custom_call.1
$region0: #{tpu_custom_call.1}
  #allocation0 [shape = 'u32[]', space=smem, size = 0x4, offset = 0x4, fixed_abs, tag = 'smem constant byte address 0x4 - core index']
  #allocation1 [shape = 'u32[144,128]{1,0:T(1,128)}', space=vmem, size = 0x12000, scoped, tag = 'internal scratch']
  %s0 = inlined_call_operand.vmem [shape: bf16[16,128], index: 0, kind: input, shape index: {}]
  %s1 = inlined_call_operand.hbm [shape: bf16[6,128,256], index: 1, kind: input, shape index: {}]
  %s2 = inlined_call_operand.hbm [shape: bf16[6,128,128], index: 2, kind: input, shape index: {}]
  %s3 = inlined_call_operand.vmem [shape: f32[16,6], index: 3, kind: input, shape index: {}]
  %s4 = inlined_call_operand.hbm [shape: f32[16,128], index: 4, kind: output, shape index: {}]
  %s5 = sld [smem:[#allocation0]]
  $region61: #{tpu_custom_call.1} parent=0
    _
  %s7 = ssub.s32 1, %s5
  %s8 = scalar_select 0, %s7, %s5
  $region1: #{tpu_custom_call.1} parent=0
    #allocation2 [shape = 'u8[131072]{0}', space=vmem, size = 0x20000, scoped, tag = 'input window, operand 1']
    #allocation3 [shape = 's32[2]{0}', space=sflag, size = 0x8, scoped, tag = 'scoped memory for tpu_custom_call.1']
    #allocation4 [shape = 's32[2]{0}', space=sflag, size = 0x8, scoped, tag = 'scoped memory for tpu_custom_call.1']
    #allocation5 [shape = 'u8[65536]{0}', space=vmem, size = 0x10000, scoped, tag = 'input window, operand 2']
    #allocation6 [shape = 's32[2]{0}', space=sflag, size = 0x8, scoped, tag = 'scoped memory for tpu_custom_call.1']
    #allocation7 [shape = 'u8[8192]{0}', space=vmem, size = 0x2000, scoped, tag = 'output window, operand 0, single buffered']
    %9 = vsyncpa [#allocation3], 0
    %s10 = scalar_lea.sflag [#allocation3], 1
    %11 = vsyncpa %s10, 0
    %12 = vsyncpa [#allocation6], 0
    %s13 = scalar_lea.sflag [#allocation6], 1
    %14 = vsyncpa %s13, 0
    %15 = vsyncpa [#allocation4], 0
    loop: start=0, step=1, limit=8
    $region2: #{tpu_custom_call.1} parent=1 // loop_pre_header
      _
    $region3: #{tpu_custom_call.1} parent=1 // loop_header
      %s17 = sphi 0, %s21
      %p18 = scmp.ge.s32.totalorder %s17, 8
      %s24 = sphi 0, %s36
      %s25 = sphi 0, %s32
      %s26 = sphi 0, %s24
      %s27 = sphi 0, %s25
      %s28 = sphi 0, %s26
      %s29 = sphi 0, %s27
      %s39 = sphi 0, %s41
      %s42 = sphi 0, %s39
      %s43 = sphi 0, %s42
      %s59 = sphi 0, %s43
      %s65 = sphi 0, %s67
      %s68 = sphi 0, %s65
      %s69 = sphi 0, %s68
      %s85 = sphi 0, %s69
      %s91 = sphi 0, %s93
      %s94 = sphi 0, %s91
      %s95 = sphi 0, %s94
      %s111 = sphi 0, %s95
      %s117 = sphi 0, %s119
      %s120 = sphi 0, %s117
      %s121 = sphi 0, %s120
      %s137 = sphi 0, %s121
      %s143 = sphi 0, %s145
      %s146 = sphi 0, %s143
      %s147 = sphi 0, %s146
      %s163 = sphi 0, %s147
    $region4: #{tpu_custom_call.1} parent=1 // loop_header_branch
      %20 = sbr.rel (%p18) target = $region8
    $region5: #{tpu_custom_call.1} parent=1 // loop_body
      %s22 = ssub.s32 %s17, 1
      %s23 = ssub.s32 %s17, 2
      %s30 = sadd.s32 1, %s25
      %p31 = scmp.ge.s32.totalorder %s30, 6
      %s32 = scalar_select %p31, 0, %s30
      %s33 = sadd.s32 1, %s24
      %s34 = scalar_select %p31, %s33, %s24
      %p35 = scmp.ge.s32.totalorder %s34, 1
      %s36 = scalar_select %p35, 0, %s34
      %s37 = ssub.s32 %s24, %s36
      %p38 = scmp.eq.s32.totalorder %s37, 0
      %s40 = sadd.s32 %s39, 1
      %s41 = scalar_select %p38, %s39, %s40
      %p44 = pneg %p38
      %p45 = scmp.eq.s32.totalorder %s17, 5
      %p46 = por %p44, %p45
      %p47 = scmp.ne.s32.totalorder %s39, %s42
      %p48 = scmp.eq.s32.totalorder %s17, 0
      %p49 = por %p47, %p48
      %p50 = scmp.ne.s32.totalorder %s39, %s42
      %p51 = scmp.eq.s32.totalorder %s22, 5
      %p52 = por %p50, %p51
      %p53 = scmp.ne.s32.totalorder %s42, %s43
      %p54 = scmp.eq.s32.totalorder %s22, 0
      %p55 = por %p53, %p54
      %p56 = scmp.ne.s32.totalorder %s42, %s43
      %p57 = scmp.eq.s32.totalorder %s23, 5
      %p58 = por %p56, %p57
      %p60 = scmp.ne.s32.totalorder %s43, %s59
      %p61 = scmp.eq.s32.totalorder %s23, 0
      %p62 = por %p60, %p61
      %s63 = ssub.s32 %s25, %s32
      %p64 = scmp.eq.s32.totalorder %s63, 0
      %s66 = sadd.s32 %s65, 1
      %s67 = scalar_select %p64, %s65, %s66
      %p70 = pneg %p64
      %p71 = scmp.eq.s32.totalorder %s17, 5
      %p72 = por %p70, %p71
      %p73 = scmp.ne.s32.totalorder %s65, %s68
      %p74 = scmp.eq.s32.totalorder %s17, 0
      %p75 = por %p73, %p74
      %p76 = scmp.ne.s32.totalorder %s65, %s68
      %p77 = scmp.eq.s32.totalorder %s22, 5
      %p78 = por %p76, %p77
      %p79 = scmp.ne.s32.totalorder %s68, %s69
      %p80 = scmp.eq.s32.totalorder %s22, 0
      %p81 = por %p79, %p80
      %p82 = scmp.ne.s32.totalorder %s68, %s69
      %p83 = scmp.eq.s32.totalorder %s23, 5
      %p84 = por %p82, %p83
      %p86 = scmp.ne.s32.totalorder %s69, %s85
      %p87 = scmp.eq.s32.totalorder %s23, 0
      %p88 = por %p86, %p87
      %s89 = ssub.s32 %s25, %s32
      %p90 = scmp.eq.s32.totalorder %s89, 0
      %s92 = sadd.s32 %s91, 1
      %s93 = scalar_select %p90, %s91, %s92
      %p96 = pneg %p90
      %p97 = scmp.eq.s32.totalorder %s17, 5
      %p98 = por %p96, %p97
      %p99 = scmp.ne.s32.totalorder %s91, %s94
      %p100 = scmp.eq.s32.totalorder %s17, 0
      %p101 = por %p99, %p100
      %p102 = scmp.ne.s32.totalorder %s91, %s94
      %p103 = scmp.eq.s32.totalorder %s22, 5
      %p104 = por %p102, %p103
      %p105 = scmp.ne.s32.totalorder %s94, %s95
      %p106 = scmp.eq.s32.totalorder %s22, 0
      %p107 = por %p105, %p106
      %p108 = scmp.ne.s32.totalorder %s94, %s95
      %p109 = scmp.eq.s32.totalorder %s23, 5
      %p110 = por %p108, %p109
      %p112 = scmp.ne.s32.totalorder %s95, %s111
      %p113 = scmp.eq.s32.totalorder %s23, 0
      %p114 = por %p112, %p113
      %s115 = ssub.s32 %s24, %s36
      %p116 = scmp.eq.s32.totalorder %s115, 0
      %s118 = sadd.s32 %s117, 1
      %s119 = scalar_select %p116, %s117, %s118
      %p122 = pneg %p116
      %p123 = scmp.eq.s32.totalorder %s17, 5
      %p124 = por %p122, %p123
      %p125 = scmp.ne.s32.totalorder %s117, %s120
      %p126 = scmp.eq.s32.totalorder %s17, 0
      %p127 = por %p125, %p126
      %p128 = scmp.ne.s32.totalorder %s117, %s120
      %p129 = scmp.eq.s32.totalorder %s22, 5
      %p130 = por %p128, %p129
      %p131 = scmp.ne.s32.totalorder %s120, %s121
      %p132 = scmp.eq.s32.totalorder %s22, 0
      %p133 = por %p131, %p132
      %p134 = scmp.ne.s32.totalorder %s120, %s121
      %p135 = scmp.eq.s32.totalorder %s23, 5
      %p136 = por %p134, %p135
      %p138 = scmp.ne.s32.totalorder %s121, %s137
      %p139 = scmp.eq.s32.totalorder %s23, 0
      %p140 = por %p138, %p139
      %s141 = ssub.s32 %s24, %s36
      %p142 = scmp.eq.s32.totalorder %s141, 0
      %s144 = sadd.s32 %s143, 1
      %s145 = scalar_select %p142, %s143, %s144
      %p148 = pneg %p142
      %p149 = scmp.eq.s32.totalorder %s17, 5
      %p150 = por %p148, %p149
      %p151 = scmp.ne.s32.totalorder %s143, %s146
      %p152 = scmp.eq.s32.totalorder %s17, 0
      %p153 = por %p151, %p152
      %p154 = scmp.ne.s32.totalorder %s143, %s146
      %p155 = scmp.eq.s32.totalorder %s22, 5
      %p156 = por %p154, %p155
      %p157 = scmp.ne.s32.totalorder %s146, %s147
      %p158 = scmp.eq.s32.totalorder %s22, 0
      %p159 = por %p157, %p158
      %p160 = scmp.ne.s32.totalorder %s146, %s147
      %p161 = scmp.eq.s32.totalorder %s23, 5
      %p162 = por %p160, %p161
      %p164 = scmp.ne.s32.totalorder %s147, %s163
      %p165 = scmp.eq.s32.totalorder %s23, 0
      %p166 = por %p164, %p165
      %p167 = scmp.le.s32.totalorder 1, %s17
      %p168 = scmp.lt.s32.totalorder %s17, 7
      %p169 = pnand %p167, %p168
      %p170 = pneg %p169
      // Predicated region
      $region9: #{tpu_custom_call.1} parent=5 // pred_check
        _
      $region10: #{tpu_custom_call.1} parent=5 // pred_check_branch
        %172 = sbr.rel (%p169) target = $region12
      $region11: #{tpu_custom_call.1} parent=5 // pred_region
        %s173 = ssub.s32 %s17, 1
        // Predicated region
        $region13: #{tpu_custom_call.1} parent=11 // pred_check
          %p174 = pneg %p55
        $region14: #{tpu_custom_call.1} parent=11 // pred_check_branch
          %176 = sbr.rel (%p174) target = $region16
        $region15: #{tpu_custom_call.1} parent=11 // pred_region
          %s177 = smul.u32 2, %s26
          %p178 = scmp.lt.s32.totalorder %s177, 1
          %s179 = scalar_select %p178, %s177, 1
          %s180 = smul.addr %s179, 4
          %s181 = scalar_lea.vmem %s0, %s180
          %s182 = smul.u32 2, %s26
        $region16: #{tpu_custom_call.1} parent=11 // pred_fallthru
          _
        // Predicated region
        $region17: #{tpu_custom_call.1} parent=11 // pred_check
          %p183 = pneg %p133
        $region18: #{tpu_custom_call.1} parent=11 // pred_check_branch
          %185 = sbr.rel (%p183) target = $region20
        $region19: #{tpu_custom_call.1} parent=11 // pred_region
          %s186 = smul.u32 2, %s26
          %p187 = scmp.lt.s32.totalorder %s186, 1
          %s188 = scalar_select %p187, %s186, 1
          %s189 = smul.addr %s188, 8
          %s190 = scalar_lea.vmem %s3, %s189
          %s191 = smul.u32 2, %s26
        $region20: #{tpu_custom_call.1} parent=11 // pred_fallthru
          _
      $region12: #{tpu_custom_call.1} parent=5 // pred_fallthru
        _
      %p192 = scmp.lt.s32.totalorder %s17, 6
      // Predicated region
      $region21: #{tpu_custom_call.1} parent=5 // pred_check
        %p193 = pneg %p192
      $region22: #{tpu_custom_call.1} parent=5 // pred_check_branch
        %195 = sbr.rel (%p193) target = $region24
      $region23: #{tpu_custom_call.1} parent=5 // pred_region
        // Predicated region
        $region25: #{tpu_custom_call.1} parent=23 // pred_check
          %p196 = pneg %p75
        $region26: #{tpu_custom_call.1} parent=23 // pred_check_branch
          %198 = sbr.rel (%p196) target = $region28
        $region27: #{tpu_custom_call.1} parent=23 // pred_region
          %s199 = sand.u32 %s65, 1
          %s200 = scalar_lea.sflag [#allocation3], %s199
          %s201 = sand.u32 %s65, 1
          %s202 = smul.addr %s201, 128
          %s203 = scalar_lea.vmem [#allocation2], %s202
          %s205 = ssub.s32 2048, 2048
          %206 = vsyncadd %s200, %s205
          %s207 = smul.addr %s25, 32
          %s208 = smul.addr %s207, 64
          %s209 = scalar_lea.hbm %s1, %s208
          %s210 = sshll.u32 %s203, 4
          %s211 = int_to_ptr.vmem [resolvable:$true] %s210
          %216 = dma.hbm_to_vmem [thread:$0]  %s209, 2048, %s211, %s200, 128, 128, 8
        $region28: #{tpu_custom_call.1} parent=23 // pred_fallthru
          _
        // Predicated region
        $region29: #{tpu_custom_call.1} parent=23 // pred_check
          %p217 = pneg %p101
        $region30: #{tpu_custom_call.1} parent=23 // pred_check_branch
          %219 = sbr.rel (%p217) target = $region32
        $region31: #{tpu_custom_call.1} parent=23 // pred_region
          %s220 = sand.u32 %s91, 1
          %s221 = scalar_lea.sflag [#allocation6], %s220
          %s222 = sand.u32 %s91, 1
          %s223 = smul.addr %s222, 64
          %s224 = scalar_lea.vmem [#allocation5], %s223
          %s226 = ssub.s32 1024, 1024
          %227 = vsyncadd %s221, %s226
          %s228 = smul.addr %s25, 16
          %s229 = smul.addr %s228, 64
          %s230 = scalar_lea.hbm %s2, %s229
          %s231 = sshll.u32 %s224, 4
          %s232 = int_to_ptr.vmem [resolvable:$true] %s231
          %237 = dma.hbm_to_vmem [thread:$0]  %s230, 1024, %s232, %s221, 64, 64, 4
        $region32: #{tpu_custom_call.1} parent=23 // pred_fallthru
          _
      $region24: #{tpu_custom_call.1} parent=5 // pred_fallthru
        _
      %p238 = scmp.le.s32.totalorder 1, %s17
      %p239 = scmp.lt.s32.totalorder %s17, 7
      %p240 = pnand %p238, %p239
      %p241 = pneg %p240
      // Predicated region
      $region33: #{tpu_custom_call.1} parent=5 // pred_check
        _
      $region34: #{tpu_custom_call.1} parent=5 // pred_check_branch
        %243 = sbr.rel (%p240) target = $region36
      $region35: #{tpu_custom_call.1} parent=5 // pred_region
        %s244 = ssub.s32 %s17, 1
        %s245 = sand.u32 %s68, 1
        %s246 = scalar_lea.sflag [#allocation3], %s245
        %s247 = sand.u32 %s68, 1
        %s248 = smul.addr %s247, 128
        %s249 = scalar_lea.vmem [#allocation2], %s248
        // Predicated region
        $region37: #{tpu_custom_call.1} parent=35 // pred_check
          %p250 = pneg %p81
        $region38: #{tpu_custom_call.1} parent=35 // pred_check_branch
          %252 = sbr.rel (%p250) target = $region40
        $region39: #{tpu_custom_call.1} parent=35 // pred_region
          %253 = dma.done %s246, 2048
        $region40: #{tpu_custom_call.1} parent=35 // pred_fallthru
          _
        %s254 = sand.u32 %s94, 1
        %s255 = scalar_lea.sflag [#allocation6], %s254
        %s256 = sand.u32 %s94, 1
        %s257 = smul.addr %s256, 64
        %s258 = scalar_lea.vmem [#allocation5], %s257
        // Predicated region
        $region41: #{tpu_custom_call.1} parent=35 // pred_check
          %p259 = pneg %p107
        $region42: #{tpu_custom_call.1} parent=35 // pred_check_branch
          %261 = sbr.rel (%p259) target = $region44
        $region43: #{tpu_custom_call.1} parent=35 // pred_region
          %262 = dma.done %s255, 1024
        $region44: #{tpu_custom_call.1} parent=35 // pred_fallthru
          _
        %s263 = smul.u32 2, %s26
        %p264 = scmp.lt.s32.totalorder %s263, 1
        %s265 = scalar_select %p264, %s263, 1
        %s266 = smul.addr %s265, 4
        %s267 = scalar_lea.vmem %s0, %s266
        %p268 = pneg %p55
        %p269 = pneg %p52
        %s270 = sand.u32 %s68, 1
        %s271 = scalar_lea.sflag [#allocation3], %s270
        %s272 = sand.u32 %s68, 1
        %s273 = smul.addr %s272, 128
        %s274 = scalar_lea.vmem [#allocation2], %s273
        %p275 = pneg %p81
        %p276 = pneg %p78
        %s277 = sand.u32 %s94, 1
        %s278 = scalar_lea.sflag [#allocation6], %s277
        %s279 = sand.u32 %s94, 1
        %s280 = smul.addr %s279, 64
        %s281 = scalar_lea.vmem [#allocation5], %s280
        %p282 = pneg %p107
        %p283 = pneg %p104
        %s284 = smul.u32 2, %s26
        %p285 = scmp.lt.s32.totalorder %s284, 1
        %s286 = scalar_select %p285, %s284, 1
        %s287 = smul.addr %s286, 8
        %s288 = scalar_lea.vmem %s3, %s287
        %p289 = pneg %p133
        %p290 = pneg %p130
        %p291 = pneg %p159
        %p292 = pneg %p156
        %s293 = smul.u32 2, %s26
        %p294 = scmp.lt.s32.totalorder %s293, 1
        %s295 = scalar_select %p294, %s293, 1
        %s296 = smul.addr %s295, 4
        %s297 = scalar_lea.vmem %s0, %s296
        %s298 = smul.u32 2, %s26
        %s299 = smul.u32 2, %s26
        %p300 = scmp.lt.s32.totalorder %s299, 1
        %s301 = scalar_select %p300, %s299, 1
        %s302 = smul.addr %s301, 8
        %s303 = scalar_lea.vmem %s3, %s302
        %s304 = smul.u32 2, %s26
        %s305 = smul.u32 2, %s26
        %p307 = scmp.eq.s32.totalorder %s27, 0
        // Predicated region
        $region45: #{tpu_custom_call.1} parent=35 // pred_check
          %p308 = pneg %p307
        $region46: #{tpu_custom_call.1} parent=35 // pred_check_branch
          %310 = sbr.rel (%p308) target = $region48
        $region47: #{tpu_custom_call.1} parent=35 // pred_region
          %311 = vst [vmem:[#allocation7] sm:$0xff] 0.0
          %312 = vst [vmem:[#allocation7 + $0x8] sm:$0xff] 0.0
        $region48: #{tpu_custom_call.1} parent=35 // pred_fallthru
          _
        %v313 = vld [vmem:[%s297] sm:$0xf]
        %v314 = vld [vmem:[%s297 + $0x4] sm:$0xf]
        %v315 = vld [vmem:[%s249] sm:$0xff]
        %v316 = vld [vmem:[%s249 + $0x8] sm:$0xff]
        %v317 = vld [vmem:[%s249 + $0x10] sm:$0xff]
        %v318 = vld [vmem:[%s249 + $0x18] sm:$0xff]
        %v319 = vld [vmem:[%s249 + $0x20] sm:$0xff]
        %v320 = vld [vmem:[%s249 + $0x28] sm:$0xff]
        %v321 = vld [vmem:[%s249 + $0x30] sm:$0xff]
        %v322 = vld [vmem:[%s249 + $0x38] sm:$0xff]
        %v323 = vld [vmem:[%s249 + $0x40] sm:$0xff]
        %v324 = vld [vmem:[%s249 + $0x48] sm:$0xff]
        %v325 = vld [vmem:[%s249 + $0x50] sm:$0xff]
        %v326 = vld [vmem:[%s249 + $0x58] sm:$0xff]
        %v327 = vld [vmem:[%s249 + $0x60] sm:$0xff]
        %v328 = vld [vmem:[%s249 + $0x68] sm:$0xff]
        %v329 = vld [vmem:[%s249 + $0x70] sm:$0xff]
        %v330 = vld [vmem:[%s249 + $0x78] sm:$0xff]
        %v333 = vunpack.c.l.b16 %v313
        %v334 = vunpack.c.l.b16 %v314
        %v335 = vpack.c.b16 %v334, %v333
        %v353 = vunpack.c.l.b16 %v315
        %v354 = vunpack.c.h.b16 %v315
        %v355 = vunpack.c.l.b16 %v316
        %v356 = vunpack.c.h.b16 %v316
        %v357 = vunpack.c.l.b16 %v317
        %v358 = vunpack.c.h.b16 %v317
        %v359 = vunpack.c.l.b16 %v318
        %v360 = vunpack.c.h.b16 %v318
        %v361 = vunpack.c.l.b16 %v319
        %v362 = vunpack.c.h.b16 %v319
        %v363 = vunpack.c.l.b16 %v320
        %v364 = vunpack.c.h.b16 %v320
        %v365 = vunpack.c.l.b16 %v321
        %v366 = vunpack.c.h.b16 %v321
        %v367 = vunpack.c.l.b16 %v322
        %v368 = vunpack.c.h.b16 %v322
        %v369 = vunpack.c.l.b16 %v323
        %v370 = vunpack.c.h.b16 %v323
        %v371 = vunpack.c.l.b16 %v324
        %v372 = vunpack.c.h.b16 %v324
        %v373 = vunpack.c.l.b16 %v325
        %v374 = vunpack.c.h.b16 %v325
        %v375 = vunpack.c.l.b16 %v326
        %v376 = vunpack.c.h.b16 %v326
        %v377 = vunpack.c.l.b16 %v327
        %v378 = vunpack.c.h.b16 %v327
        %v379 = vunpack.c.l.b16 %v328
        %v380 = vunpack.c.h.b16 %v328
        %v381 = vunpack.c.l.b16 %v329
        %v382 = vunpack.c.h.b16 %v329
        %v383 = vunpack.c.l.b16 %v330
        %v384 = vunpack.c.h.b16 %v330
        %v385 = vpack.c.b16 %v355, %v353
        %v386 = vpack.c.b16 %v356, %v354
        %v387 = vpack.c.b16 %v359, %v357
        %v388 = vpack.c.b16 %v360, %v358
        %v389 = vpack.c.b16 %v363, %v361
        %v390 = vpack.c.b16 %v364, %v362
        %v391 = vpack.c.b16 %v367, %v365
        %v392 = vpack.c.b16 %v368, %v366
        %v393 = vpack.c.b16 %v371, %v369
        %v394 = vpack.c.b16 %v372, %v370
        %v395 = vpack.c.b16 %v375, %v373
        %v396 = vpack.c.b16 %v376, %v374
        %v397 = vpack.c.b16 %v379, %v377
        %v398 = vpack.c.b16 %v380, %v378
        %v399 = vpack.c.b16 %v383, %v381
        %v400 = vpack.c.b16 %v384, %v382
        %417 = vmatprep.subr.bf16.mxu0 %v400
        %418 = vmatpush1.bf16.msra.mxu0 %v399
        %419 = vmatprep.subr.bf16.mxu0 %v398
        %420 = vmatpush1.bf16.msra.mxu0 %v397
        %421 = vmatprep.subr.bf16.mxu0 %v396
        %422 = vmatpush1.bf16.msra.mxu0 %v395
        %423 = vmatprep.subr.bf16.mxu0 %v394
        %424 = vmatpush1.bf16.msra.mxu0 %v393
        %425 = vmatprep.subr.bf16.mxu0 %v392
        %426 = vmatpush1.bf16.msra.mxu0 %v391
        %427 = vmatprep.subr.bf16.mxu0 %v390
        %428 = vmatpush1.bf16.msra.mxu0 %v389
        %429 = vmatprep.subr.bf16.mxu0 %v388
        %430 = vmatpush1.bf16.msra.mxu0 %v387
        %431 = vmatprep.subr.bf16.mxu0 %v386
        %432 = vmatpush1.bf16.msra.mxu0 %v385
        %433 = vmatprep.subr.bf16.mxu0 0
        %434 = vmatpush2.bf16.msra.mxu0 0
        %435 = vmatprep.subr.bf16.mxu0 0
        %436 = vmatpush2.bf16.msra.mxu0 0
        %437 = vmatprep.subr.bf16.mxu0 0
        %438 = vmatpush2.bf16.msra.mxu0 0
        %439 = vmatprep.subr.bf16.mxu0 0
        %440 = vmatpush2.bf16.msra.mxu0 0
        %441 = vmatprep.subr.bf16.mxu0 0
        %442 = vmatpush2.bf16.msra.mxu0 0
        %443 = vmatprep.subr.bf16.mxu0 0
        %444 = vmatpush2.bf16.msra.mxu0 0
        %445 = vmatprep.subr.bf16.mxu0 0
        %446 = vmatpush2.bf16.msra.mxu0 0
        %447 = vmatprep.subr.bf16.mxu0 0
        %448 = vmatpush2.bf16.msra.mxu0 0
        %449 = vmatprep.mubr.bf16.mxu0 0
        %450 = vmatmul.mubr.bf16.gmra.mxu0 %v335
        %v451 = vpop.f32.mrf.mxu0
        %v452 = vadd.f32 0.0, %v451
        %v453 = vpop.f32.mrf.mxu0
        %v454 = vadd.f32 0.0, %v453
        %v455 = vpop.f32.mrf.mxu0
        %v456 = vadd.f32 0.0, %v455
        %v457 = vpop.f32.mrf.mxu0
        %v458 = vadd.f32 0.0, %v457
        %459 = vdwg.mxu0
        %v460 = vxor.u32 %v452, 2147483648
        %v461 = vxor.u32 %v456, 2147483648
        %v462 = vmul.f32 %v460, 1.442695
        %v463 = vpow.pop %v462
        %v464 = vmul.f32 %v461, 1.442695
        %v465 = vpow.pop %v464
        %v466 = vadd.f32 %v463, 1.0
        %v467 = vadd.f32 %v465, 1.0
        %v468 = vrcp.pop %v466
        %v469 = vmul.f32 1.0, %v468
        %v470 = vrcp.pop %v467
        %v471 = vmul.f32 1.0, %v470
        %v472 = vmul.f32 %v452, %v469
        %v473 = vmul.f32 %v456, %v471
        %v474 = vmul.f32 %v472, %v454
        %v475 = vmul.f32 %v473, %v458
        %v476 = vlaneseq
        %v477 = vand.u32 %v476, 127
        %v478 = vstv %s27
        %vm479 = vcmp.eq.s32.totalorder %v477, %v478
        %v480 = vld [vmem:[%s303] sm:$0xff]
        %v481 = vld [vmem:[%s303 + $0x8] sm:$0xff]
        %v482 = vsel %vm479, %v480, 0.0
        %v483 = vsel %vm479, %v481, 0.0
        %vm484 = vcmask 48128
        %v485 = vsel %vm484, %v482, 0.0
        %486 = vadd.xlane.f32.xlu0 %v485
        %v487 = vpop.xlane.xlu0 %486
        %v488 = vsel %vm484, %v483, 0.0
        %489 = vadd.xlane.f32.xlu0 %v488
        %v490 = vpop.xlane.xlu0 %489
        %v491 = vpack.c.bf16 %v475, %v474
        %v492 = vld [vmem:[%s258] sm:$0xf]
        %v493 = vld [vmem:[%s258 + $0x4] sm:$0xf]
        %v494 = vld [vmem:[%s258 + $0x8] sm:$0xf]
        %v495 = vld [vmem:[%s258 + $0xc] sm:$0xf]
        %v496 = vld [vmem:[%s258 + $0x10] sm:$0xf]
        %v497 = vld [vmem:[%s258 + $0x14] sm:$0xf]
        %v498 = vld [vmem:[%s258 + $0x18] sm:$0xf]
        %v499 = vld [vmem:[%s258 + $0x1c] sm:$0xf]
        %v500 = vld [vmem:[%s258 + $0x20] sm:$0xf]
        %v501 = vld [vmem:[%s258 + $0x24] sm:$0xf]
        %v502 = vld [vmem:[%s258 + $0x28] sm:$0xf]
        %v503 = vld [vmem:[%s258 + $0x2c] sm:$0xf]
        %v504 = vld [vmem:[%s258 + $0x30] sm:$0xf]
        %v505 = vld [vmem:[%s258 + $0x34] sm:$0xf]
        %v506 = vld [vmem:[%s258 + $0x38] sm:$0xf]
        %v507 = vld [vmem:[%s258 + $0x3c] sm:$0xf]
        %v524 = vunpack.c.l.b16 %v492
        %v525 = vunpack.c.l.b16 %v493
        %v526 = vunpack.c.l.b16 %v494
        %v527 = vunpack.c.l.b16 %v495
        %v528 = vunpack.c.l.b16 %v496
        %v529 = vunpack.c.l.b16 %v497
        %v530 = vunpack.c.l.b16 %v498
        %v531 = vunpack.c.l.b16 %v499
        %v532 = vunpack.c.l.b16 %v500
        %v533 = vunpack.c.l.b16 %v501
        %v534 = vunpack.c.l.b16 %v502
        %v535 = vunpack.c.l.b16 %v503
        %v536 = vunpack.c.l.b16 %v504
        %v537 = vunpack.c.l.b16 %v505
        %v538 = vunpack.c.l.b16 %v506
        %v539 = vunpack.c.l.b16 %v507
        %v540 = vpack.c.b16 %v525, %v524
        %v541 = vpack.c.b16 %v527, %v526
        %v542 = vpack.c.b16 %v529, %v528
        %v543 = vpack.c.b16 %v531, %v530
        %v544 = vpack.c.b16 %v533, %v532
        %v545 = vpack.c.b16 %v535, %v534
        %v546 = vpack.c.b16 %v537, %v536
        %v547 = vpack.c.b16 %v539, %v538
        %556 = vmatprep.subr.bf16.mxu0 0
        %557 = vmatpush1.bf16.msra.mxu0 %v547
        %558 = vmatprep.subr.bf16.mxu0 0
        %559 = vmatpush1.bf16.msra.mxu0 %v546
        %560 = vmatprep.subr.bf16.mxu0 0
        %561 = vmatpush1.bf16.msra.mxu0 %v545
        %562 = vmatprep.subr.bf16.mxu0 0
        %563 = vmatpush1.bf16.msra.mxu0 %v544
        %564 = vmatprep.subr.bf16.mxu0 0
        %565 = vmatpush1.bf16.msra.mxu0 %v543
        %566 = vmatprep.subr.bf16.mxu0 0
        %567 = vmatpush1.bf16.msra.mxu0 %v542
        %568 = vmatprep.subr.bf16.mxu0 0
        %569 = vmatpush1.bf16.msra.mxu0 %v541
        %570 = vmatprep.subr.bf16.mxu0 0
        %571 = vmatpush1.bf16.msra.mxu0 %v540
        %572 = vmatprep.subr.bf16.mxu0 0
        %573 = vmatpush2.bf16.msra.mxu0 0
        %574 = vmatprep.subr.bf16.mxu0 0
        %575 = vmatpush2.bf16.msra.mxu0 0
        %576 = vmatprep.subr.bf16.mxu0 0
        %577 = vmatpush2.bf16.msra.mxu0 0
        %578 = vmatprep.subr.bf16.mxu0 0
        %579 = vmatpush2.bf16.msra.mxu0 0
        %580 = vmatprep.subr.bf16.mxu0 0
        %581 = vmatpush2.bf16.msra.mxu0 0
        %582 = vmatprep.subr.bf16.mxu0 0
        %583 = vmatpush2.bf16.msra.mxu0 0
        %584 = vmatprep.subr.bf16.mxu0 0
        %585 = vmatpush2.bf16.msra.mxu0 0
        %586 = vmatprep.subr.bf16.mxu0 0
        %587 = vmatpush2.bf16.msra.mxu0 0
        %588 = vmatprep.mubr.bf16.mxu0 0
        %589 = vmatmul.mubr.bf16.gmra.mxu0 %v491
        %v590 = vpop.f32.mrf.mxu0
        %v591 = vadd.f32 0.0, %v590
        %v592 = vpop.f32.mrf.mxu0
        %v593 = vpop.f32.mrf.mxu0
        %v594 = vadd.f32 0.0, %v593
        %v595 = vpop.f32.mrf.mxu0
        %596 = vdwg.mxu0
        %v597 = vld [vmem:[#allocation7] sm:$0xff]
        %v598 = vld [vmem:[#allocation7 + $0x8] sm:$0xff]
        %v599 = vmul.f32 %v591, %v487
        %v600 = vmul.f32 %v594, %v490
        %v601 = vadd.f32 %v597, %v599
        %v602 = vadd.f32 %v598, %v600
        %603 = vst [vmem:[#allocation7] sm:$0xff] %v601
        %604 = vst [vmem:[#allocation7 + $0x8] sm:$0xff] %v602
        // Predicated region
        $region49: #{tpu_custom_call.1} parent=35 // pred_check
          %p605 = pneg %p156
        $region50: #{tpu_custom_call.1} parent=35 // pred_check_branch
          %607 = sbr.rel (%p605) target = $region52
        $region51: #{tpu_custom_call.1} parent=35 // pred_region
          %s608 = smul.u32 2, %s26
          %s610 = ssub.s32 256, 256
          %611 = vsyncadd [#allocation4], %s610
          %s612 = smul.addr %s608, 128
          %s613 = scalar_lea.hbm %s4, %s612
          %s614 = sshll.u32 [#allocation7], 4
          %s615 = int_to_ptr.vmem [resolvable:$true] %s614
          %620 = dma.vmem_to_hbm [thread:$0]  %s615, 256, %s613, [#allocation4], 128, 128, 8
        $region52: #{tpu_custom_call.1} parent=35 // pred_fallthru
          _
        // Predicated region
        $region53: #{tpu_custom_call.1} parent=35 // pred_check
          %p621 = pneg %p156
        $region54: #{tpu_custom_call.1} parent=35 // pred_check_branch
          %623 = sbr.rel (%p621) target = $region56
        $region55: #{tpu_custom_call.1} parent=35 // pred_region
          %624 = dma.done [#allocation4], 256
        $region56: #{tpu_custom_call.1} parent=35 // pred_fallthru
          _
      $region36: #{tpu_custom_call.1} parent=5 // pred_fallthru
        _
      %p625 = scmp.le.s32.totalorder 2, %s17
      // Predicated region
      $region57: #{tpu_custom_call.1} parent=5 // pred_check
        %p626 = pneg %p625
      $region58: #{tpu_custom_call.1} parent=5 // pred_check_branch
        %628 = sbr.rel (%p626) target = $region60
      $region59: #{tpu_custom_call.1} parent=5 // pred_region
        %s629 = ssub.s32 %s17, 2
      $region60: #{tpu_custom_call.1} parent=5 // pred_fallthru
        _
    $region6: #{tpu_custom_call.1} parent=1 // loop_footer
      %s21 = sadd.s32 1, %s17
    $region7: #{tpu_custom_call.1} parent=1 // loop_footer_branch
      %16 = sbr.rel target = $region3
    $region8: #{tpu_custom_call.1} parent=1 // loop_exit
      _
    %630 = vsyncpa [#allocation3], 1
    %s631 = scalar_lea.sflag [#allocation3], 1
    %632 = vsyncpa %s631, 1
    %633 = vsyncpa [#allocation6], 1
    %s634 = scalar_lea.sflag [#allocation6], 1
    %635 = vsyncpa %s634, 1
    %636 = vsyncpa [#allocation4], 1
    %s637 = scalar_lea.sflag [#allocation4], 1
    %638 = vsyncpa %s637, 1

</llo_original>
